<compile_context>
chip_gen: v6e
topology: v6e:2x2x1
jax: 0.10.0
libtpu: 0.0.40
codegen_flags: <defaults>
</compile_context>

<pallas_src>
import functools

import jax
import jax.numpy as jnp
from jax.experimental import pallas as pl
from jax.experimental.pallas import tpu as pltpu


# --------------------------------------------------------------------------
# Kernels
# --------------------------------------------------------------------------
def _aggr_kernel_3d(x_ref, o_ref, *, method, scale, acc_dtype):
    """x_ref: (tile_src, num_neigh, input_dim) ; o_ref: (tile_src, input_dim)."""
    x = x_ref[...]
    if method == "max":
        r = jnp.max(x, axis=1)
    else:  # sum / mean: accumulate in acc_dtype (f32 for narrow floats / mean)
        r = jnp.sum(x.astype(acc_dtype), axis=1)
        if scale is not None:  # mean: multiply by compile-time 1/num_neigh
            r = r * scale
    o_ref[...] = r.astype(o_ref.dtype)


def _aggr_kernel_2d(x_ref, o_ref, *, method, num_neigh, input_dim, scale,
                    acc_dtype):
    """Lane-dense path.

    x_ref: (tile_src, num_neigh*input_dim) -- one whole neighbor row per source
    is contiguous along the lane axis.  Segmented reduction via statically
    unrolled slices (num_neigh is small for GraphSAGE fan-outs).
    o_ref: (tile_src, input_dim)
    """
    def seg(n):
        s = x_ref[:, n * input_dim:(n + 1) * input_dim]
        return s if method == "max" else s.astype(acc_dtype)

    acc = seg(0)
    for n in range(1, num_neigh):
        if method == "max":
            acc = jnp.maximum(acc, seg(n))
        else:
            acc = acc + seg(n)
    if scale is not None:  # mean
        acc = acc * scale
    o_ref[...] = acc.astype(o_ref.dtype)


# --------------------------------------------------------------------------
# Tiling heuristics
# --------------------------------------------------------------------------
def _choose_tile_src(num_src, row_bytes,
                     target_block_bytes=6 << 20,   # ~6 MiB input block
                     max_block_bytes=14 << 20):    # keeps 2x block < 32 MiB
    """Pick tile_src so each input block is multi-MiB (HBM-roofline friendly)."""
    if num_src * row_bytes <= max_block_bytes:
        return num_src                       # single block covers everything
    tile = max(1, min(num_src, target_block_bytes // row_bytes))
    if tile >= 8:
        tile -= tile % 8                     # sublane-friendly
    return max(int(tile), 1)


# --------------------------------------------------------------------------
# Wrapper (== NeighborAggregator.forward)
# --------------------------------------------------------------------------
def neighbor_aggregator(neighbor_feature, aggr_neighbor_method="mean",
                        tile_src=None):
    """Pallas equivalent of NeighborAggregator.forward.

    Args:
      neighbor_feature: (num_src, num_neigh, input_dim)
      aggr_neighbor_method: one of "mean", "sum", "max"
      tile_src: optional override of the auto-chosen source-row tile.
    Returns:
      (num_src, input_dim) aggregated features (same dtype as the input).
    """
    if aggr_neighbor_method not in ("mean", "sum", "max"):
        raise ValueError(
            "Unknown aggr type, expected sum, max, or mean, but got {}".format(
                aggr_neighbor_method))

    num_src, num_neigh, input_dim = neighbor_feature.shape
    in_dtype = neighbor_feature.dtype
    itemsize = jnp.dtype(in_dtype).itemsize
    out_dtype = in_dtype

    # Accumulation dtype / mean scale (f32 accumulation for narrow floats).
    if aggr_neighbor_method == "mean":
        acc_dtype = jnp.float32
        scale = 1.0 / float(num_neigh)
    else:
        scale = None
        if jnp.issubdtype(in_dtype, jnp.floating) and itemsize < 4:
            acc_dtype = jnp.float32
        else:
            acc_dtype = in_dtype

    # ---- tile selection -------------------------------------------------
    row_bytes = num_neigh * input_dim * itemsize
    if tile_src is None:
        tile_src = _choose_tile_src(num_src, row_bytes)
    tile_src = int(min(max(int(tile_src), 1), num_src))
    # Output block is (tile_src, input_dim): second-to-last dim must be a
    # multiple of 8 or span the full num_src.
    if tile_src != num_src and tile_src % 8 != 0:
        tile_src = min(num_src, 8) if tile_src < 8 else tile_src - (tile_src % 8)

    grid = (pl.cdiv(num_src, tile_src),)

    # ---- lane-dense path selection ---------------------------------------
    flat = num_neigh * input_dim
    use_lane_dense = (
        input_dim % 128 != 0            # narrow feature dim -> masked lanes
        and flat % 128 == 0             # whole neighbor row is lane-dense
        and num_neigh <= 64             # bounded static unroll
        and itemsize == 4               # 32-bit element slices
        and (tile_src == num_src or tile_src % 8 == 0)
    )

    # ---- VMEM budget / cost hint -----------------------------------------
    in_block_bytes = tile_src * row_bytes
    out_block_bytes = tile_src * input_dim * jnp.dtype(out_dtype).itemsize
    vmem_limit = int(min(
        48 << 20,
        max(24 << 20, 2 * in_block_bytes + 2 * out_block_bytes + (4 << 20))))

    cost = pl.CostEstimate(
        flops=int(num_src) * int(num_neigh) * int(input_dim),
        transcendentals=0,
        bytes_accessed=int(num_src * num_neigh * input_dim * itemsize
                           + num_src * input_dim
                           * jnp.dtype(out_dtype).itemsize))

    out_shape = jax.ShapeDtypeStruct((num_src, input_dim), out_dtype)
    out_spec = pl.BlockSpec((tile_src, input_dim), lambda i: (i, 0))
    cparams = pltpu.CompilerParams(dimension_semantics=("parallel",),
                                   vmem_limit_bytes=vmem_limit)

    if use_lane_dense:
        x2d = neighbor_feature.reshape(num_src, flat)  # free (contiguous)
        kernel = functools.partial(
            _aggr_kernel_2d, method=aggr_neighbor_method, num_neigh=num_neigh,
            input_dim=input_dim, scale=scale, acc_dtype=acc_dtype)
        return pl.pallas_call(
            kernel,
            out_shape=out_shape,
            grid=grid,
            in_specs=[pl.BlockSpec((tile_src, flat), lambda i: (i, 0))],
            out_specs=out_spec,
            compiler_params=cparams,
            cost_estimate=cost,
        )(x2d)
    else:
        kernel = functools.partial(
            _aggr_kernel_3d, method=aggr_neighbor_method, scale=scale,
            acc_dtype=acc_dtype)
        return pl.pallas_call(
            kernel,
            out_shape=out_shape,
            grid=grid,
            in_specs=[pl.BlockSpec((tile_src, num_neigh, input_dim),
                                   lambda i: (i, 0, 0))],
            out_specs=out_spec,
            compiler_params=cparams,
            cost_estimate=cost,
        )(neighbor_feature)


# --------------------------------------------------------------------------
# Self-test
# --------------------------------------------------------------------------
if __name__ == "__main__":
    key = jax.random.PRNGKey(0)
    ok = True

    def ref_agg(x, method):
        xf = x.astype(jnp.float32)
        if method == "mean":
            r = jnp.mean(xf, axis=1)
        elif method == "sum":
            r = jnp.sum(xf, axis=1)
        else:
            r = jnp.max(xf, axis=1)
        return r.astype(x.dtype)

    # (shape, dtype, tile_src override)
    cases = [
        ((16, 8, 32), jnp.float32, None),   # lane-dense 2D path (8*32=256)
        ((16, 8, 32), jnp.bfloat16, None),  # 3D path, f32 accumulation
        ((20, 5, 128), jnp.float32, 8),     # 3D path, partial tail block
    ]
    for shape, dtype, tile in cases:
        key, sub = jax.random.split(key)
        x = jax.random.normal(sub, shape, dtype=jnp.float32).astype(dtype)
        for method in ("mean", "sum", "max"):
            out = jax.block_until_ready(
                neighbor_aggregator(x, aggr_neighbor_method=method,
                                    tile_src=tile))
            ref = ref_agg(x, method)
            tol = 1e-5 if dtype == jnp.float32 else 2e-2
            if out.shape != ref.shape or not jnp.allclose(
                    out.astype(jnp.float32), ref.astype(jnp.float32),
                    atol=tol, rtol=tol):
                ok = False
                print(f"MISMATCH shape={shape} dtype={dtype} method={method}")

    if ok:
        print("KERNEL_OK")
</pallas_src>

<mosaic_0001>
module attributes {stable_mosaic.version = 11 : i64} {
  func.func @_aggr_kernel_2d(%arg0: i32, %arg1: memref<16x256xf32, #tpu.memory_space<vmem>>, %arg2: memref<16x32xf32, #tpu.memory_space<vmem>>) attributes {dimension_semantics = [#tpu.dimension_semantics<parallel>], iteration_bounds = array<i64: 1>, scalar_prefetch = 0 : i64, scratch_operands = 0 : i64, tpu.core_type = #tpu.core_type<tc>, window_params = [{transform_indices = @transform_0, window_bounds = array<i64: 16, 256>}, {transform_indices = @transform_1, window_bounds = array<i64: 16, 32>}]} {
    %c0 = arith.constant 0 : index
    %c0_0 = arith.constant 0 : index
    %0 = vector.load %arg1[%c0, %c0_0] : memref<16x256xf32, #tpu.memory_space<vmem>>, vector<16x32xf32>
    %c0_1 = arith.constant 0 : index
    %c32 = arith.constant 32 : index
    %1 = vector.load %arg1[%c0_1, %c32] : memref<16x256xf32, #tpu.memory_space<vmem>>, vector<16x32xf32>
    %2 = arith.addf %0, %1 : vector<16x32xf32>
    %c0_2 = arith.constant 0 : index
    %c64 = arith.constant 64 : index
    %3 = vector.load %arg1[%c0_2, %c64] : memref<16x256xf32, #tpu.memory_space<vmem>>, vector<16x32xf32>
    %4 = arith.addf %2, %3 : vector<16x32xf32>
    %c0_3 = arith.constant 0 : index
    %c96 = arith.constant 96 : index
    %5 = vector.load %arg1[%c0_3, %c96] : memref<16x256xf32, #tpu.memory_space<vmem>>, vector<16x32xf32>
    %6 = arith.addf %4, %5 : vector<16x32xf32>
    %c0_4 = arith.constant 0 : index
    %c128 = arith.constant 128 : index
    %7 = vector.load %arg1[%c0_4, %c128] : memref<16x256xf32, #tpu.memory_space<vmem>>, vector<16x32xf32>
    %8 = arith.addf %6, %7 : vector<16x32xf32>
    %c0_5 = arith.constant 0 : index
    %c160 = arith.constant 160 : index
    %9 = vector.load %arg1[%c0_5, %c160] : memref<16x256xf32, #tpu.memory_space<vmem>>, vector<16x32xf32>
    %10 = arith.addf %8, %9 : vector<16x32xf32>
    %c0_6 = arith.constant 0 : index
    %c192 = arith.constant 192 : index
    %11 = vector.load %arg1[%c0_6, %c192] : memref<16x256xf32, #tpu.memory_space<vmem>>, vector<16x32xf32>
    %12 = arith.addf %10, %11 : vector<16x32xf32>
    %c0_7 = arith.constant 0 : index
    %c224 = arith.constant 224 : index
    %13 = vector.load %arg1[%c0_7, %c224] : memref<16x256xf32, #tpu.memory_space<vmem>>, vector<16x32xf32>
    %14 = arith.addf %12, %13 : vector<16x32xf32>
    %cst = arith.constant 1.250000e-01 : f32
    %15 = vector.broadcast %cst : f32 to vector<16x32xf32>
    %16 = arith.mulf %14, %15 : vector<16x32xf32>
    %c0_8 = arith.constant 0 : index
    %c0_9 = arith.constant 0 : index
    %17 = vector.load %arg2[%c0_8, %c0_9] : memref<16x32xf32, #tpu.memory_space<vmem>>, vector<16x32xf32>
    tpu.vector_store %arg2[%c0_8, %c0_9], %16 {strides = array<i32>} : memref<16x32xf32, #tpu.memory_space<vmem>>, vector<16x32xf32>,
    return
  }
  func.func @transform_0(%arg0: i32) -> (i32, i32) {
    %c0_i32 = arith.constant 0 : i32
    %c0_i32_0 = arith.constant 0 : i32
    return %arg0, %c0_i32 : i32, i32
  }
  func.func @transform_1(%arg0: i32) -> (i32, i32) {
    %c0_i32 = arith.constant 0 : i32
    %c0_i32_0 = arith.constant 0 : i32
    return %arg0, %c0_i32 : i32, i32
  }
}

</mosaic_0001>

<llo_original>
// kernel: tpu_custom_call.1
$region0: #{tpu_custom_call.1}
  #allocation0 [shape = 'u32[]', space=smem, size = 0x4, offset = 0x4, fixed_abs, tag = 'smem constant byte address 0x4 - core index']
  #allocation1 [shape = 'u32[144,128]{1,0:T(1,128)}', space=vmem, size = 0x12000, scoped, tag = 'internal scratch']
  %s0 = inlined_call_operand.hbm [shape: f32[16,256], index: 0, kind: input, shape index: {}]
  %s1 = inlined_call_operand.hbm [shape: f32[16,32], index: 1, kind: output, shape index: {}]
  %s2 = sld [smem:[#allocation0]]
  $region18: #{tpu_custom_call.1} parent=0
    _
  %s4 = ssub.s32 1, %s2
  %s5 = scalar_select 0, %s4, %s2
  $region1: #{tpu_custom_call.1} parent=0
    #allocation2 [shape = 'u8[16384]{0}', space=vmem, size = 0x4000, scoped, tag = 'input window, operand 0, single buffered']
    #allocation3 [shape = 's32[1]{0}', space=sflag, size = 0x4, scoped, tag = 'scoped memory for tpu_custom_call.1']
    #allocation4 [shape = 's32[1]{0}', space=sflag, size = 0x4, scoped, tag = 'scoped memory for tpu_custom_call.1']
    #allocation5 [shape = 'u8[8192]{0}', space=vmem, size = 0x2000, scoped, tag = 'output window, operand 0, single buffered']
    %6 = vsyncpa [#allocation3], 0
    %7 = vsyncpa [#allocation4], 0
    // Predicated region
    $region2: #{tpu_custom_call.1} parent=1 // pred_check
      _
    $region3: #{tpu_custom_call.1} parent=1 // pred_check_branch
      %9 = sbr.rel (0) target = $region5
    $region4: #{tpu_custom_call.1} parent=1 // pred_region
      %s11 = ssub.s32 512, 512
      %12 = vsyncadd [#allocation3], %s11
      %s13 = sshll.u32 [#allocation2], 4
      %s14 = int_to_ptr.vmem [resolvable:$true] %s13
      %19 = dma.hbm_to_vmem [thread:$0]  %s0, 512, %s14, [#allocation3], 256, 256, 16
    $region5: #{tpu_custom_call.1} parent=1 // pred_fallthru
      _
    // Predicated region
    $region6: #{tpu_custom_call.1} parent=1 // pred_check
      _
    $region7: #{tpu_custom_call.1} parent=1 // pred_check_branch
      %21 = sbr.rel (0) target = $region9
    $region8: #{tpu_custom_call.1} parent=1 // pred_region
      %22 = dma.done [#allocation3], 512
    $region9: #{tpu_custom_call.1} parent=1 // pred_fallthru
      _
    %v23 = vld [vmem:[#allocation2] sm:$0xff]
    %v24 = vld [vmem:[#allocation2 + $0x10] sm:$0xff]
    %27 = vrot.lane.b32.xlu0 %v23, 96
    %v28 = vpop.permute.xlu0 %27
    %29 = vrot.lane.b32.xlu0 %v24, 96
    %v30 = vpop.permute.xlu0 %29
    %v33 = vadd.f32 %v23, %v28
    %v34 = vadd.f32 %v24, %v30
    %35 = vrot.lane.b32.xlu0 %v23, 64
    %v36 = vpop.permute.xlu0 %35
    %37 = vrot.lane.b32.xlu0 %v24, 64
    %v38 = vpop.permute.xlu0 %37
    %v41 = vadd.f32 %v33, %v36
    %v42 = vadd.f32 %v34, %v38
    %43 = vrot.lane.b32.xlu0 %v23, 32
    %v44 = vpop.permute.xlu0 %43
    %45 = vrot.lane.b32.xlu0 %v24, 32
    %v46 = vpop.permute.xlu0 %45
    %v49 = vadd.f32 %v41, %v44
    %v50 = vadd.f32 %v42, %v46
    %v51 = vld [vmem:[#allocation2 + $0x8] sm:$0xff]
    %v52 = vld [vmem:[#allocation2 + $0x18] sm:$0xff]
    %v53 = vadd.f32 %v49, %v51
    %v54 = vadd.f32 %v50, %v52
    %57 = vrot.lane.b32.xlu0 %v51, 96
    %v58 = vpop.permute.xlu0 %57
    %59 = vrot.lane.b32.xlu0 %v52, 96
    %v60 = vpop.permute.xlu0 %59
    %v63 = vadd.f32 %v53, %v58
    %v64 = vadd.f32 %v54, %v60
    %65 = vrot.lane.b32.xlu0 %v51, 64
    %v66 = vpop.permute.xlu0 %65
    %67 = vrot.lane.b32.xlu0 %v52, 64
    %v68 = vpop.permute.xlu0 %67
    %v71 = vadd.f32 %v63, %v66
    %v72 = vadd.f32 %v64, %v68
    %73 = vrot.lane.b32.xlu0 %v51, 32
    %v74 = vpop.permute.xlu0 %73
    %75 = vrot.lane.b32.xlu0 %v52, 32
    %v76 = vpop.permute.xlu0 %75
    %v79 = vadd.f32 %v71, %v74
    %v80 = vadd.f32 %v72, %v76
    %v81 = vmul.f32 %v79, 0.125
    %v82 = vmul.f32 %v80, 0.125
    %vm83 = vcmask 261120
    %84 = vst.msk [vmem:[#allocation5] sm:$0xff] %vm83, %v81
    %85 = vst.msk [vmem:[#allocation5 + $0x8] sm:$0xff] %vm83, %v82
    // Predicated region
    $region10: #{tpu_custom_call.1} parent=1 // pred_check
      _
    $region11: #{tpu_custom_call.1} parent=1 // pred_check_branch
      %87 = sbr.rel (0) target = $region13
    $region12: #{tpu_custom_call.1} parent=1 // pred_region
      %s89 = ssub.s32 256, 256
      %90 = vsyncadd [#allocation4], %s89
      %s91 = sshll.u32 [#allocation5], 4
      %s92 = int_to_ptr.vmem [resolvable:$true] %s91
      %97 = dma.vmem_to_hbm [thread:$0]  %s92, 256, %s1, [#allocation4], 128, 128, 8
    $region13: #{tpu_custom_call.1} parent=1 // pred_fallthru
      _
    // Predicated region
    $region14: #{tpu_custom_call.1} parent=1 // pred_check
      _
    $region15: #{tpu_custom_call.1} parent=1 // pred_check_branch
      %99 = sbr.rel (0) target = $region17
    $region16: #{tpu_custom_call.1} parent=1 // pred_region
      %100 = dma.done [#allocation4], 256
    $region17: #{tpu_custom_call.1} parent=1 // pred_fallthru
      _
    %101 = vsyncpa [#allocation3], 1
    %102 = vsyncpa [#allocation4], 1

</llo_original>
